<compile_context>
chip_gen: v5e
topology: v5e:2x2
jax: 0.10.0
libtpu: 0.0.40
codegen_flags: <defaults>
</compile_context>

<pallas_src>
import functools

import jax
import jax.numpy as jnp
from jax import lax
from jax.experimental import pallas as pl
from jax.experimental.pallas import tpu as pltpu

F = 20          # feature dim fixed by the module (Linear(20, 20), rand_weight (20, 20))

# Packed-parameter layout (8-aligned section starts so all static sublane
# slices are aligned; static slices on a VMEM ref are free).
WT_ROW = 0      # rows [ 0, 20): W.T
B_ROW = 24      # rows [24, 32): bias, replicated to 8 rows
RW_ROW = 32     # rows [32, 52): rand_weight
P_ROWS = 56     # padded to a multiple of 8


def _round_up(n, m):
    return ((n + m - 1) // m) * m


def fancy_mlp_kernel(x_ref, p_ref, out_ref, sum_acc, sq_acc, *, n_valid, needs_mask):
    # x_ref: (TM, 20) f32 row tile of the (padded) batch, VMEM.
    # p_ref: (56, 20) packed params, VMEM, resident across the whole grid.
    # out_ref: (1,) f32 SMEM -> the finished scalar (written at the last step).
    # sum_acc / sq_acc: (1, 1) f32 VMEM accumulators carried across grid steps.
    i = pl.program_id(0)
    tm = x_ref.shape[0]

    @pl.when(i == 0)
    def _init():
        sum_acc[...] = jnp.zeros_like(sum_acc)
        sq_acc[...] = jnp.zeros_like(sq_acc)

    x = x_ref[...]
    wt = p_ref[WT_ROW:WT_ROW + F, :]                       # (20, 20) = W.T
    rw = p_ref[RW_ROW:RW_ROW + F, :]                       # (20, 20) = rand_weight
    if tm == 8:
        # bias was pre-replicated to 8 rows -> plain aligned static slice.
        bvec = p_ref[B_ROW:B_ROW + 8, :]                   # (8, 20)
    else:
        # stride-0 sublane-broadcast read of the bias row -> (tm, 20), no
        # broadcast_in_dim at the add sites.
        bvec = p_ref[pl.ds(B_ROW, tm, stride=0), :]

    # Three serially dependent tiny dots; MXU shape/dtype tuning is pointless
    # here (each is <1% of one MXU pass) -- throughput comes from batching TM.
    h = jnp.dot(x, wt, preferred_element_type=jnp.float32) + bvec
    h = jnp.maximum(jnp.dot(h, rw, preferred_element_type=jnp.float32) + 1.0, 0.0)
    h = jnp.dot(h, wt, preferred_element_type=jnp.float32) + bvec

    if needs_mask:
        # Padding rows are NOT zero (bias / +1), so zero them exactly before
        # the reductions.
        rows = lax.broadcasted_iota(jnp.int32, (tm, F), 0) + i * tm
        h = jnp.where(rows < n_valid, h, 0.0)

    sum_acc[...] += jnp.sum(h, keepdims=True)              # (1, 1)
    sq_acc[...] += jnp.sum(h * h, keepdims=True)           # (1, 1)

    @pl.when(i == pl.num_programs(0) - 1)
    def _finalize():
        total = sum_acc[...]                                # (1, 1) sum(h)
        norm = jnp.sqrt(sq_acc[...])                        # (1, 1) ||h||_F

        # k = number of halvings = max(0, ceil(log2(norm))), from the f32 bits.
        bits = pltpu.bitcast(norm, jnp.int32)               # norm >= 0 -> sign bit 0
        exp = ((bits >> 23) & 0xFF) - 127                    # unbiased exponent
        frac = bits & 0x7FFFFF
        k = exp + jnp.where(frac != 0, jnp.int32(1), jnp.int32(0))
        k = jnp.clip(k, 0, 126)
        # scale = 2^-k exactly, assembled in the exponent field.
        scale = pltpu.bitcast((127 - k) << 23, jnp.float32)

        # if norm_after_halvings < 0.8: h *= 10   (norm * 2^-k is exact)
        scale = jnp.where(norm * scale < 0.8, scale * 10.0, scale)

        # sum(scale * h) == scale * sum(h)  (power-of-two scale, *10 applied once)
        out_ref[0] = jnp.sum(total * scale)


def pack_params(w, b, rw):
    """One-time packing of (W, b, rand_weight) into a single (56, 20) f32 slab."""
    p = jnp.zeros((P_ROWS, F), jnp.float32)
    p = p.at[WT_ROW:WT_ROW + F, :].set(w.T.astype(jnp.float32))
    p = p.at[B_ROW:B_ROW + 8, :].set(
        jnp.broadcast_to(b.astype(jnp.float32)[None, :], (8, F)))
    p = p.at[RW_ROW:RW_ROW + F, :].set(rw.astype(jnp.float32))
    return p


@jax.jit
def fancy_mlp_forward(x, packed_params):
    B = x.shape[0]
    # Row-tile size: full 8-sublane tiles for tiny batches, 256 rows per block
    # once the batch is large enough to amortize the per-step overhead.
    TM = 256 if B >= 256 else _round_up(B, 8)
    B_pad = _round_up(B, TM)
    x = x.astype(jnp.float32)
    if B_pad != B:
        x = jnp.pad(x, ((0, B_pad - B), (0, 0)))

    kernel = functools.partial(fancy_mlp_kernel,
                               n_valid=B, needs_mask=(B_pad != B))

    out = pl.pallas_call(
        kernel,
        out_shape=jax.ShapeDtypeStruct((1,), jnp.float32),
        grid_spec=pltpu.PrefetchScalarGridSpec(
            num_scalar_prefetch=0,
            grid=(B_pad // TM,),
            in_specs=[
                pl.BlockSpec((TM, F), lambda i: (i, 0)),        # x row tiles
                pl.BlockSpec((P_ROWS, F), lambda i: (0, 0)),    # params, resident
            ],
            out_specs=pl.BlockSpec(memory_space=pltpu.MemorySpace.SMEM),
            scratch_shapes=[
                pltpu.VMEM((1, 1), jnp.float32),                # running sum(h)
                pltpu.VMEM((1, 1), jnp.float32),                # running sum(h*h)
            ],
        ),
        compiler_params=pltpu.CompilerParams(
            # Reduction axis (accumulators carried) -> "arbitrary".
            dimension_semantics=("arbitrary",),
        ),
    )(x, packed_params)
    return out[0]


def _reference(x, W, b, rw):
    """Pure-JAX (eager) reference following the PyTorch module literally."""
    h = x @ W.T + b
    h = jnp.maximum(h @ rw + 1.0, 0.0)
    h = h @ W.T + b
    while float(jnp.linalg.norm(h)) > 1.0:
        h = h / 2
    if float(jnp.linalg.norm(h)) < 0.8:
        h = h * 10
    return jnp.sum(h)


if __name__ == "__main__":
    key = jax.random.PRNGKey(0)
    k_w, k_b, k_rw, k_x = jax.random.split(key, 4)

    # nn.Linear(20, 20) default init: U(-1/sqrt(20), 1/sqrt(20))
    bound = 1.0 / jnp.sqrt(jnp.float32(F))
    W = jax.random.uniform(k_w, (F, F), jnp.float32, -bound, bound)
    b = jax.random.uniform(k_b, (F,), jnp.float32, -bound, bound)
    # torch.rand((20, 20)): U[0, 1)
    rand_weight = jax.random.uniform(k_rw, (F, F), jnp.float32)

    # small batch of inputs, (B, 20)
    x = jax.random.uniform(k_x, (2, F), jnp.float32)

    # One-time parameter packing (outside the jitted hot path; weights reused).
    params = jax.block_until_ready(pack_params(W, b, rand_weight))

    out = fancy_mlp_forward(x, params)
    out = jax.block_until_ready(out)

    ref = _reference(x, W, b, rand_weight)
    assert jnp.allclose(out, ref, rtol=1e-4, atol=1e-5), (out, ref)

    print("KERNEL_OK")
</pallas_src>

<mosaic_0001>
module attributes {stable_mosaic.version = 11 : i64} {
  func.func @fancy_mlp_kernel(%arg0: i32, %arg1: memref<8x20xf32, #tpu.memory_space<vmem>>, %arg2: memref<56x20xf32, #tpu.memory_space<vmem>>, %arg3: memref<1xf32, #tpu.memory_space<smem>>, %arg4: memref<1x1xf32, #tpu.memory_space<vmem>>, %arg5: memref<1x1xf32, #tpu.memory_space<vmem>>) attributes {dimension_semantics = [#tpu.dimension_semantics<arbitrary>], iteration_bounds = array<i64: 1>, scalar_prefetch = 0 : i64, scratch_operands = 2 : i64, tpu.core_type = #tpu.core_type<tc>, window_params = [{transform_indices = @transform_0, window_bounds = array<i64: 8, 20>}, {pipeline_mode = #tpu.pipeline_mode<synchronous>, transform_indices = @transform_1, window_bounds = array<i64: 56, 20>}, {transform_indices = @transform_2, window_bounds = array<i64: 1>}]} {
    %c0_i32 = arith.constant 0 : i32
    %0 = arith.cmpi eq, %arg0, %c0_i32 : i32
    %1 = arith.extui %0 : i1 to i32
    %c0_i32_0 = arith.constant 0 : i32
    %2 = arith.cmpi ne, %1, %c0_i32_0 : i32
    scf.if %2 {
      %cst_23 = arith.constant 0.000000e+00 : f32
      %44 = vector.broadcast %cst_23 : f32 to vector<1x1xf32>
      %c0_24 = arith.constant 0 : index
      %c0_25 = arith.constant 0 : index
      %45 = vector.load %arg4[%c0_24, %c0_25] : memref<1x1xf32, #tpu.memory_space<vmem>>, vector<1x1xf32>
      tpu.vector_store %arg4[%c0_24, %c0_25], %44 {strides = array<i32>} : memref<1x1xf32, #tpu.memory_space<vmem>>, vector<1x1xf32>,
      %cst_26 = arith.constant 0.000000e+00 : f32
      %46 = vector.broadcast %cst_26 : f32 to vector<1x1xf32>
      %c0_27 = arith.constant 0 : index
      %c0_28 = arith.constant 0 : index
      %47 = vector.load %arg5[%c0_27, %c0_28] : memref<1x1xf32, #tpu.memory_space<vmem>>, vector<1x1xf32>
      tpu.vector_store %arg5[%c0_27, %c0_28], %46 {strides = array<i32>} : memref<1x1xf32, #tpu.memory_space<vmem>>, vector<1x1xf32>,
    } else {
    }
    %c0 = arith.constant 0 : index
    %c0_1 = arith.constant 0 : index
    %3 = vector.load %arg1[%c0, %c0_1] : memref<8x20xf32, #tpu.memory_space<vmem>>, vector<8x20xf32>
    %c0_2 = arith.constant 0 : index
    %c0_3 = arith.constant 0 : index
    %4 = vector.load %arg2[%c0_2, %c0_3] : memref<56x20xf32, #tpu.memory_space<vmem>>, vector<20x20xf32>
    %c32 = arith.constant 32 : index
    %c0_4 = arith.constant 0 : index
    %5 = vector.load %arg2[%c32, %c0_4] : memref<56x20xf32, #tpu.memory_space<vmem>>, vector<20x20xf32>
    %c24 = arith.constant 24 : index
    %c0_5 = arith.constant 0 : index
    %6 = vector.load %arg2[%c24, %c0_5] : memref<56x20xf32, #tpu.memory_space<vmem>>, vector<8x20xf32>
    %cst = arith.constant dense<0.000000e+00> : vector<8x20xf32>
    %7 = tpu.matmul %3, %4, %cst {dimension_numbers = #tpu.dot_dimension_numbers<[1], [0], [0], [1], [0, 0, 1, 1], [], []>} : vector<8x20xf32>, vector<20x20xf32>, vector<8x20xf32> -> vector<8x20xf32>
    %8 = arith.addf %7, %6 : vector<8x20xf32>
    %cst_6 = arith.constant dense<0.000000e+00> : vector<8x20xf32>
    %9 = tpu.matmul %8, %5, %cst_6 {dimension_numbers = #tpu.dot_dimension_numbers<[1], [0], [0], [1], [0, 0, 1, 1], [], []>} : vector<8x20xf32>, vector<20x20xf32>, vector<8x20xf32> -> vector<8x20xf32>
    %cst_7 = arith.constant 1.000000e+00 : f32
    %10 = vector.broadcast %cst_7 : f32 to vector<8x20xf32>
    %11 = arith.addf %9, %10 : vector<8x20xf32>
    %cst_8 = arith.constant 0.000000e+00 : f32
    %12 = vector.broadcast %cst_8 : f32 to vector<8x20xf32>
    %13 = arith.maximumf %11, %12 : vector<8x20xf32>
    %cst_9 = arith.constant dense<0.000000e+00> : vector<8x20xf32>
    %14 = tpu.matmul %13, %4, %cst_9 {dimension_numbers = #tpu.dot_dimension_numbers<[1], [0], [0], [1], [0, 0, 1, 1], [], []>} : vector<8x20xf32>, vector<20x20xf32>, vector<8x20xf32> -> vector<8x20xf32>
    %15 = arith.addf %14, %6 : vector<8x20xf32>
    %16 = tpu.iota {dimensions = array<i32: 0>} : vector<8x20xi32>
    %c8_i32 = arith.constant 8 : i32
    %17 = arith.muli %arg0, %c8_i32 : i32
    %18 = vector.broadcast %17 : i32 to vector<8x20xi32>
    %19 = arith.addi %16, %18 : vector<8x20xi32>
    %c2_i32 = arith.constant 2 : i32
    %20 = vector.broadcast %c2_i32 : i32 to vector<8x20xi32>
    %21 = arith.cmpi slt, %19, %20 : vector<8x20xi32>
    %cst_10 = arith.constant 0.000000e+00 : f32
    %22 = vector.broadcast %cst_10 : f32 to vector<8x20xf32>
    %23 = arith.select %21, %15, %22 : vector<8x20xi1>, vector<8x20xf32>
    %c0_11 = arith.constant 0 : index
    %c0_12 = arith.constant 0 : index
    %24 = vector.load %arg4[%c0_11, %c0_12] : memref<1x1xf32, #tpu.memory_space<vmem>>, vector<1x1xf32>
    %25 = vector.shape_cast %23 : vector<8x20xf32> to vector<1x8x20xf32>
    %cst_13 = arith.constant dense<0.000000e+00> : vector<1xf32>
    %26 = vector.multi_reduction <add>, %25, %cst_13 [1, 2] : vector<1x8x20xf32> to vector<1xf32>
    %27 = vector.shape_cast %26 : vector<1xf32> to vector<1x1x1xf32>
    %28 = vector.extract %27[0, 0, 0] : f32 from vector<1x1x1xf32>
    %29 = vector.broadcast %28 : f32 to vector<1x1xf32>
    %30 = arith.addf %24, %29 : vector<1x1xf32>
    %c0_14 = arith.constant 0 : index
    %c0_15 = arith.constant 0 : index
    %31 = vector.load %arg4[%c0_14, %c0_15] : memref<1x1xf32, #tpu.memory_space<vmem>>, vector<1x1xf32>
    tpu.vector_store %arg4[%c0_14, %c0_15], %30 {strides = array<i32>} : memref<1x1xf32, #tpu.memory_space<vmem>>, vector<1x1xf32>,
    %c0_16 = arith.constant 0 : index
    %c0_17 = arith.constant 0 : index
    %32 = vector.load %arg5[%c0_16, %c0_17] : memref<1x1xf32, #tpu.memory_space<vmem>>, vector<1x1xf32>
    %33 = arith.mulf %23, %23 : vector<8x20xf32>
    %34 = vector.shape_cast %33 : vector<8x20xf32> to vector<1x8x20xf32>
    %cst_18 = arith.constant dense<0.000000e+00> : vector<1xf32>
    %35 = vector.multi_reduction <add>, %34, %cst_18 [1, 2] : vector<1x8x20xf32> to vector<1xf32>
    %36 = vector.shape_cast %35 : vector<1xf32> to vector<1x1x1xf32>
    %37 = vector.extract %36[0, 0, 0] : f32 from vector<1x1x1xf32>
    %38 = vector.broadcast %37 : f32 to vector<1x1xf32>
    %39 = arith.addf %32, %38 : vector<1x1xf32>
    %c0_19 = arith.constant 0 : index
    %c0_20 = arith.constant 0 : index
    %40 = vector.load %arg5[%c0_19, %c0_20] : memref<1x1xf32, #tpu.memory_space<vmem>>, vector<1x1xf32>
    tpu.vector_store %arg5[%c0_19, %c0_20], %39 {strides = array<i32>} : memref<1x1xf32, #tpu.memory_space<vmem>>, vector<1x1xf32>,
    %c0_i32_21 = arith.constant 0 : i32
    %41 = arith.cmpi eq, %arg0, %c0_i32_21 : i32
    %42 = arith.extui %41 : i1 to i32
    %c0_i32_22 = arith.constant 0 : i32
    %43 = arith.cmpi ne, %42, %c0_i32_22 : i32
    scf.if %43 {
      %c0_23 = arith.constant 0 : index
      %c0_24 = arith.constant 0 : index
      %44 = vector.load %arg4[%c0_23, %c0_24] : memref<1x1xf32, #tpu.memory_space<vmem>>, vector<1x1xf32>
      %c0_25 = arith.constant 0 : index
      %c0_26 = arith.constant 0 : index
      %45 = vector.load %arg5[%c0_25, %c0_26] : memref<1x1xf32, #tpu.memory_space<vmem>>, vector<1x1xf32>
      %46 = math.sqrt %45 : vector<1x1xf32>
      %47 = tpu.bitcast %46 : vector<1x1xf32> -> vector<1x1xi32>
      %c23_i32 = arith.constant 23 : i32
      %48 = vector.broadcast %c23_i32 : i32 to vector<1x1xi32>
      %49 = arith.shrsi %47, %48 : vector<1x1xi32>
      %c255_i32 = arith.constant 255 : i32
      %50 = vector.broadcast %c255_i32 : i32 to vector<1x1xi32>
      %51 = arith.andi %49, %50 : vector<1x1xi32>
      %c127_i32 = arith.constant 127 : i32
      %52 = vector.broadcast %c127_i32 : i32 to vector<1x1xi32>
      %53 = arith.subi %51, %52 : vector<1x1xi32>
      %c8388607_i32 = arith.constant 8388607 : i32
      %54 = vector.broadcast %c8388607_i32 : i32 to vector<1x1xi32>
      %55 = arith.andi %47, %54 : vector<1x1xi32>
      %c0_i32_27 = arith.constant 0 : i32
      %56 = vector.broadcast %c0_i32_27 : i32 to vector<1x1xi32>
      %57 = arith.cmpi ne, %55, %56 : vector<1x1xi32>
      %c1_i32 = arith.constant 1 : i32
      %c0_i32_28 = arith.constant 0 : i32
      %58 = vector.broadcast %c1_i32 : i32 to vector<1x1xi32>
      %59 = vector.broadcast %c0_i32_28 : i32 to vector<1x1xi32>
      %60 = arith.select %57, %58, %59 : vector<1x1xi1>, vector<1x1xi32>
      %61 = arith.addi %53, %60 : vector<1x1xi32>
      %c0_i32_29 = arith.constant 0 : i32
      %c126_i32 = arith.constant 126 : i32
      %62 = vector.broadcast %c0_i32_29 : i32 to vector<1x1xi32>
      %63 = arith.maxsi %62, %61 : vector<1x1xi32>
      %64 = vector.broadcast %c126_i32 : i32 to vector<1x1xi32>
      %65 = arith.minsi %64, %63 : vector<1x1xi32>
      %c127_i32_30 = arith.constant 127 : i32
      %66 = vector.broadcast %c127_i32_30 : i32 to vector<1x1xi32>
      %67 = arith.subi %66, %65 : vector<1x1xi32>
      %c23_i32_31 = arith.constant 23 : i32
      %68 = vector.broadcast %c23_i32_31 : i32 to vector<1x1xi32>
      %69 = arith.shli %67, %68 : vector<1x1xi32>
      %70 = tpu.bitcast %69 : vector<1x1xi32> -> vector<1x1xf32>
      %71 = arith.mulf %46, %70 : vector<1x1xf32>
      %cst_32 = arith.constant 8.000000e-01 : f32
      %72 = vector.broadcast %cst_32 : f32 to vector<1x1xf32>
      %73 = arith.cmpf olt, %71, %72 : vector<1x1xf32>
      %cst_33 = arith.constant 1.000000e+01 : f32
      %74 = vector.broadcast %cst_33 : f32 to vector<1x1xf32>
      %75 = arith.mulf %70, %74 : vector<1x1xf32>
      %76 = arith.select %73, %75, %70 : vector<1x1xi1>, vector<1x1xf32>
      %77 = arith.mulf %44, %76 : vector<1x1xf32>
      %78 = vector.shape_cast %77 : vector<1x1xf32> to vector<1x1x1xf32>
      %cst_34 = arith.constant dense<0.000000e+00> : vector<1xf32>
      %79 = vector.multi_reduction <add>, %78, %cst_34 [1, 2] : vector<1x1x1xf32> to vector<1xf32>
      %80 = vector.shape_cast %79 : vector<1xf32> to vector<1x1x1xf32>
      %81 = vector.extract %80[0, 0, 0] : f32 from vector<1x1x1xf32>
      %c0_35 = arith.constant 0 : index
      %82 = memref.load %arg3[%c0_35] : memref<1xf32, #tpu.memory_space<smem>>
      memref.store %81, %arg3[%c0_35] : memref<1xf32, #tpu.memory_space<smem>>
    } else {
    }
    return
  }
  func.func @transform_0(%arg0: i32) -> (i32, i32) {
    %c0_i32 = arith.constant 0 : i32
    %c0_i32_0 = arith.constant 0 : i32
    return %arg0, %c0_i32 : i32, i32
  }
  func.func @transform_1(%arg0: i32) -> (i32, i32) {
    %c0_i32 = arith.constant 0 : i32
    %c0_i32_0 = arith.constant 0 : i32
    %c0_i32_1 = arith.constant 0 : i32
    return %c0_i32, %c0_i32_0 : i32, i32
  }
  func.func @transform_2(%arg0: i32) -> i32 {
    %c0_i32 = arith.constant 0 : i32
    %c0_i32_0 = arith.constant 0 : i32
    return %c0_i32 : i32
  }
}

</mosaic_0001>

<llo_original>
// kernel: fancy_mlp_forward.1
$region0: #{fancy_mlp_forward.1}
  #allocation0 [shape = 'u32[]', space=smem, size = 0x4, offset = 0x4, fixed_abs, tag = 'smem constant byte address 0x4 - core index']
  #allocation1 [shape = 'u32[72,128]{1,0:T(1,128)}', space=vmem, size = 0x9000, scoped, tag = 'internal scratch']
  #allocation2 [shape = 'f32[1,1]{1,0:T(1,128)}', space=vmem, size = 0x200, scoped, tag = 'scratch operand']
  #allocation3 [shape = 'f32[1,1]{1,0:T(1,128)}', space=vmem, size = 0x200, scoped, tag = 'scratch operand']
  %s0 = inlined_call_operand.vmem [shape: f32[8,20], index: 0, kind: input, shape index: {}]
  %s1 = inlined_call_operand.vmem [shape: f32[56,20], index: 1, kind: input, shape index: {}]
  %s2 = inlined_call_operand.hbm [shape: f32[1], index: 2, kind: output, shape index: {}]
  %s3 = sld [smem:[#allocation0]]
  $region26: #{fancy_mlp_forward.1} parent=0
    _
  %s5 = ssub.s32 1, %s3
  %s6 = scalar_select 0, %s5, %s3
  $region1: #{fancy_mlp_forward.1} parent=0
    #allocation4 [shape = 'u8[512]{0}', space=smem, size = 0x200, scoped, tag = 'output window, operand 0, single buffered']
    #allocation5 [shape = 's32[1]{0}', space=sflag, size = 0x4, scoped, tag = 'scoped memory for fancy_mlp_forward.1']
    %7 = vsyncpa [#allocation5], 0
    // Predicated region
    $region2: #{fancy_mlp_forward.1} parent=1 // pred_check
      _
    $region3: #{fancy_mlp_forward.1} parent=1 // pred_check_branch
      %9 = sbr.rel (0) target = $region5
    $region4: #{fancy_mlp_forward.1} parent=1 // pred_region
      _
    $region5: #{fancy_mlp_forward.1} parent=1 // pred_fallthru
      _
    // Predicated region
    $region6: #{fancy_mlp_forward.1} parent=1 // pred_check
      _
    $region7: #{fancy_mlp_forward.1} parent=1 // pred_check_branch
      %11 = sbr.rel (0) target = $region9
    $region8: #{fancy_mlp_forward.1} parent=1 // pred_region
      _
    $region9: #{fancy_mlp_forward.1} parent=1 // pred_fallthru
      _
    %p12 = scmp.eq.s32.totalorder 0, 0
    // Predicated region
    $region10: #{fancy_mlp_forward.1} parent=1 // pred_check
      %p13 = pneg %p12
    $region11: #{fancy_mlp_forward.1} parent=1 // pred_check_branch
      %15 = sbr.rel (%p13) target = $region13
    $region12: #{fancy_mlp_forward.1} parent=1 // pred_region
      %vm16 = vcmask 0
      %17 = vst.msk [vmem:[#allocation2] sm:$0x1] %vm16, 0.0
      %18 = vst.msk [vmem:[#allocation3] sm:$0x1] %vm16, 0.0
    $region13: #{fancy_mlp_forward.1} parent=1 // pred_fallthru
      _
    %v19 = vld [vmem:[%s0] sm:$0xff]
    %v20 = vld [vmem:[%s1] sm:$0xff]
    %v21 = vld [vmem:[%s1 + $0x8] sm:$0xff]
    %v22 = vld [vmem:[%s1 + $0x10] sm:$0xf]
    %v23 = vld [vmem:[%s1 + $0x20] sm:$0xff]
    %v24 = vld [vmem:[%s1 + $0x28] sm:$0xff]
    %v25 = vld [vmem:[%s1 + $0x30] sm:$0xf]
    %v26 = vld [vmem:[%s1 + $0x18] sm:$0xff]
    %vm27 = vcmask 162816
    %v29 = vsel %vm27, %v19, 0
    %vm31 = vcmask 1043456
    %v33 = vsel %vm31, %v22, 0
    %35 = vmatpush.msra.mxu0 0.0
    %36 = vmatpush.msra.mxu0 0.0
    %37 = vmatpush.msra.mxu0 0.0
    %38 = vmatpush.msra.mxu0 0.0
    %39 = vmatpush.msra.mxu0 0.0
    %40 = vmatpush.msra.mxu0 0.0
    %41 = vmatpush.msra.mxu0 0.0
    %42 = vmatpush.msra.mxu0 0.0
    %43 = vmatpush.msra.mxu0 0.0
    %44 = vmatpush.msra.mxu0 0.0
    %45 = vmatpush.msra.mxu0 0.0
    %46 = vmatpush.msra.mxu0 0.0
    %47 = vmatpush.msra.mxu0 0.0
    %48 = vmatpush.msra.mxu0 %v33
    %49 = vmatpush.msra.mxu0 %v21
    %50 = vmatpush.msra.mxu0 %v20
    %51 = vmatmul.f32.gmra.mxu0 %v29
    %v52 = vpop.f32.mrf.mxu0
    %v53 = vadd.f32 %v26, %v52
    %54 = vdwg.mxu0
    %v56 = vsel %vm27, %v53, 0
    %v59 = vsel %vm31, %v25, 0
    %61 = vmatpush.msra.mxu0 0.0
    %62 = vmatpush.msra.mxu0 0.0
    %63 = vmatpush.msra.mxu0 0.0
    %64 = vmatpush.msra.mxu0 0.0
    %65 = vmatpush.msra.mxu0 0.0
    %66 = vmatpush.msra.mxu0 0.0
    %67 = vmatpush.msra.mxu0 0.0
    %68 = vmatpush.msra.mxu0 0.0
    %69 = vmatpush.msra.mxu0 0.0
    %70 = vmatpush.msra.mxu0 0.0
    %71 = vmatpush.msra.mxu0 0.0
    %72 = vmatpush.msra.mxu0 0.0
    %73 = vmatpush.msra.mxu0 0.0
    %74 = vmatpush.msra.mxu0 %v59
    %75 = vmatpush.msra.mxu0 %v24
    %76 = vmatpush.msra.mxu0 %v23
    %77 = vmatmul.f32.gmra.mxu0 %v56
    %v78 = vpop.f32.mrf.mxu0
    %v79 = vadd.f32 1.0, %v78
    %80 = vdwg.mxu0
    %v81 = vmax.f32 %v79, 0.0
    %v83 = vsel %vm27, %v81, 0
    %85 = vmatpush.msra.mxu0 0.0
    %86 = vmatpush.msra.mxu0 0.0
    %87 = vmatpush.msra.mxu0 0.0
    %88 = vmatpush.msra.mxu0 0.0
    %89 = vmatpush.msra.mxu0 0.0
    %90 = vmatpush.msra.mxu0 0.0
    %91 = vmatpush.msra.mxu0 0.0
    %92 = vmatpush.msra.mxu0 0.0
    %93 = vmatpush.msra.mxu0 0.0
    %94 = vmatpush.msra.mxu0 0.0
    %95 = vmatpush.msra.mxu0 0.0
    %96 = vmatpush.msra.mxu0 0.0
    %97 = vmatpush.msra.mxu0 0.0
    %98 = vmatpush.msra.mxu0 %v33
    %99 = vmatpush.msra.mxu0 %v21
    %100 = vmatpush.msra.mxu0 %v20
    %101 = vmatmul.f32.gmra.mxu0 %v83
    %v102 = vpop.f32.mrf.mxu0
    %v103 = vadd.f32 %v26, %v102
    %104 = vdwg.mxu0
    %v105 = vlaneseq
    %v106 = vshrl.u32 %v105, 7
    %s107 = smul.u32 0, 8
    %v108 = vstv %s107
    %v109 = vadd.s32 %v106, %v108
    %vm110 = vcmp.lt.s32.totalorder %v109, 2
    %v111 = vsel %vm110, %v103, 0.0
    %v112 = vld [vmem:[#allocation2] sm:$0x1]
    %v113 = vsel %vm27, %v111, 0.0
    %114 = vadd.xlane.f32.xlu0 %v113
    %v115 = vpop.xlane.xlu0 %114
    %v116 = vrot.slane %v115, 4
    %v117 = vadd.f32 %v115, %v116
    %v118 = vrot.slane %v117, 2
    %v119 = vadd.f32 %v117, %v118
    %v120 = vrot.slane %v119, 1
    %v121 = vadd.f32 %v119, %v120
    %s122 = vtos %v121
    %v123 = vstv %s122
    %v124 = vadd.f32 %v112, %v123
    %vm125 = vcmask 0
    %126 = vst.msk [vmem:[#allocation2] sm:$0x1] %vm125, %v124
    %v127 = vld [vmem:[#allocation3] sm:$0x1]
    %v128 = vmul.f32 %v111, %v111
    %v129 = vsel %vm27, %v128, 0.0
    %130 = vadd.xlane.f32.xlu0 %v129
    %v131 = vpop.xlane.xlu0 %130
    %v132 = vrot.slane %v131, 4
    %v133 = vadd.f32 %v131, %v132
    %v134 = vrot.slane %v133, 2
    %v135 = vadd.f32 %v133, %v134
    %v136 = vrot.slane %v135, 1
    %v137 = vadd.f32 %v135, %v136
    %s138 = vtos %v137
    %v139 = vstv %s138
    %v140 = vadd.f32 %v127, %v139
    %141 = vst.msk [vmem:[#allocation3] sm:$0x1] %vm125, %v140
    // Predicated region
    $region14: #{fancy_mlp_forward.1} parent=1 // pred_check
      %p142 = pneg %p12
    $region15: #{fancy_mlp_forward.1} parent=1 // pred_check_branch
      %144 = sbr.rel (%p142) target = $region17
    $region16: #{fancy_mlp_forward.1} parent=1 // pred_region
      %v145 = vld [vmem:[#allocation2] sm:$0x1]
      %v146 = vld [vmem:[#allocation3] sm:$0x1]
      %v147 = vrsqrt.pop %v146
      %v148 = vmul.f32 %v147, %v146
      %v149 = vmul.f32 %v148, %v147
      %v150 = vmul.f32 0.5, %v149
      %v151 = vsub.f32 1.5, %v150
      %v152 = vmul.f32 %v147, %v151
      %v153 = vmul.f32 %v146, %v152
      %vm154 = vcmp.eq.f32.partialorder %v146, inf
      %v155 = vsel %vm154, %v146, %v153
      %vm156 = vcmp.eq.f32.partialorder %v146, 0.0
      %v157 = vand.u32 %v146, 2147483648
      %v158 = vsel %vm156, %v157, %v155
      %v160 = vshra.s32 %v158, 23
      %v161 = vand.u32 %v160, 255
      %v162 = vsub.s32 %v161, 127
      %v163 = vand.u32 %v158, 8388607
      %vm164 = vcmp.ne.s32.totalorder %v163, 0
      %v165 = vsel %vm164, 1, 0
      %v166 = vadd.s32 %v162, %v165
      %vm167 = vcmp.gt.s32.totalorder %v166, 0
      %v168 = vsel %vm167, %v166, 0
      %vm169 = vcmp.lt.s32.totalorder %v168, 126
      %v170 = vsel %vm169, %v168, 126
      %v171 = vsub.s32 127, %v170
      %v172 = vshll.u32 %v171, 23
      %v174 = vmul.f32 %v158, %v172
      %vm175 = vcmp.lt.f32.partialorder %v174, 0.8
      %v176 = vmul.f32 %v172, 10.0
      %v177 = vsel %vm175, %v176, %v172
      %v178 = vmul.f32 %v145, %v177
      %v179 = vadd.f32 %v178, 0.0
      %s180 = vtos %v179
      %s181 = scalar_lea.smem [#allocation4], 0
      %182 = sst [smem:[%s181]] %s180
    $region17: #{fancy_mlp_forward.1} parent=1 // pred_fallthru
      _
    // Predicated region
    $region18: #{fancy_mlp_forward.1} parent=1 // pred_check
      _
    $region19: #{fancy_mlp_forward.1} parent=1 // pred_check_branch
      %184 = sbr.rel (0) target = $region21
    $region20: #{fancy_mlp_forward.1} parent=1 // pred_region
      %186 = vsyncadd [#allocation5], 0
      %s188 = sshll.u32 %s2, 4
      %s189 = int_to_ptr.hbm [resolvable:$true] %s188
      %191 = dma.smem_to_hbm [#allocation4], 16, %s189, [#allocation5]
    $region21: #{fancy_mlp_forward.1} parent=1 // pred_fallthru
      _
    // Predicated region
    $region22: #{fancy_mlp_forward.1} parent=1 // pred_check
      _
    $region23: #{fancy_mlp_forward.1} parent=1 // pred_check_branch
      %193 = sbr.rel (0) target = $region25
    $region24: #{fancy_mlp_forward.1} parent=1 // pred_region
      %195 = dma.done [#allocation5], 16
    $region25: #{fancy_mlp_forward.1} parent=1 // pred_fallthru
      _
    %196 = sfence
    %197 = vsyncpa [#allocation5], 1

</llo_original>
